<compile_context>
chip_gen: v7x
topology: tpu7x:2x2x1
jax: 0.10.0
libtpu: 0.0.40
codegen_flags: <defaults>
</compile_context>

<pallas_src>
import functools

import jax
import jax.numpy as jnp
from jax.experimental import pallas as pl
from jax.experimental.pallas import tpu as pltpu

NEG_SLOPE = 0.1   # nonlinearity='leaky_relu', negative_slope=0.1
GIN_EPS = 0.0     # GIN eps reset to 0.0


def _lrelu(v):
    return jnp.where(v >= 0, v, NEG_SLOPE * v)


def _round_up(n, m):
    return ((n + m - 1) // m) * m


# ---------- GIN encoder + hoisted FD label branch (runs once per forward) ----------
def gin_hy_kernel(emb_ref, adj_ref, w0_ref, b0_ref, w1_ref, b1_ref,
                  w2_ref, b2_ref, emb_out_ref, hy_out_ref):
    h = emb_ref[...]                       # [C, C]
    adj = adj_ref[...]                     # [C, C]
    # GIN layer 0: C -> gin_hidden (no residual, dims differ)
    agg = (1.0 + GIN_EPS) * h + jnp.dot(adj, h, preferred_element_type=jnp.float32)
    h1 = _lrelu(jnp.dot(agg, w0_ref[...], preferred_element_type=jnp.float32)
                + b0_ref[...])
    # GIN layer 1: gin_hidden -> class_emb_size (residual, dims match)
    agg = (1.0 + GIN_EPS) * h1 + jnp.dot(adj, h1, preferred_element_type=jnp.float32)
    h2 = _lrelu(jnp.dot(agg, w1_ref[...], preferred_element_type=jnp.float32)
                + b1_ref[...]) + h1
    emb_out_ref[...] = h2                  # [C, class_emb_size]
    # FD NN2 (label branch) fused here so it is NOT recomputed per batch tile.
    hy_out_ref[...] = _lrelu(jnp.dot(h2, w2_ref[...],
                                     preferred_element_type=jnp.float32)
                             + b2_ref[...])                                # [C, H]


def gin_hy_forward(label_emb, adj, w0, b0, w1, b1, fd_w2, fd_b2):
    C = label_emb.shape[0]
    E = w1.shape[1]
    H = fd_w2.shape[1]
    return pl.pallas_call(
        gin_hy_kernel,
        out_shape=(jax.ShapeDtypeStruct((C, E), jnp.float32),
                   jax.ShapeDtypeStruct((C, H), jnp.float32)),
    )(label_emb, adj, w0, b0.reshape(1, -1), w1, b1.reshape(1, -1),
      fd_w2, fd_b2)


# ------------- fused FDModel + grouped-Conv1d classifier kernel -------------
def fd_cls_kernel(x_ref, hy_ref, w1_ref, b1_ref, w3_ref, b3_ref,
                  wc_ref, bc_ref, out_ref, *, mxu_dtype):
    # FD NN1 (in_layers=1): x -> hidden
    hx = _lrelu(jnp.dot(x_ref[...], w1_ref[...],
                        preferred_element_type=jnp.float32) + b1_ref[...])   # [TB, H]
    hy = hy_ref[...]                                                         # [C, H]
    TB = hx.shape[0]
    C, H = hy.shape
    # TODO(synk): nn.Dropout(p=0.2) between fusion and the output MLP is omitted
    # (eval / predict semantics).
    # Bilinear fusion z[b,c,:] = hx[b,:] * hy[c,:], flattened so the dominant
    # output-MLP matmul is a single [TB*C, H] x [H, H] MXU op (no per-class loop).
    z = (hx[:, None, :] * hy[None, :, :]).reshape(TB * C, H)
    t = _lrelu(jnp.dot(z.astype(mxu_dtype), w3_ref[...].astype(mxu_dtype),
                       preferred_element_type=jnp.float32) + b3_ref[...])    # [TB*C, H]
    t = t.reshape(TB, C, H)
    # grouped Conv1d(kernel_size=H, groups=C): per-class lane reduction, one store.
    # (Output last dim C=8 < 128 lanes -> masked store; secondary, acceptable.)
    out_ref[...] = jnp.sum(t * wc_ref[...][None, :, :], axis=-1) + bc_ref[...]


def fd_cls_forward(x, hy, p, *, tile_b=128, mxu_dtype=jnp.float32):
    B, Dx = x.shape
    C, H = hy.shape
    # Batch tile: big enough to fill the MXU (M = tile_b*C rows), but never
    # larger than the 8-aligned batch itself.
    tb = min(tile_b, _round_up(B, 8))
    Bp = _round_up(B, tb)
    if Bp != B:
        x = jnp.pad(x, ((0, Bp - B), (0, 0)))   # pad, slice result back below
    full = lambda shape: pl.BlockSpec(shape, lambda i: (0, 0))
    kernel = functools.partial(fd_cls_kernel, mxu_dtype=mxu_dtype)
    out = pl.pallas_call(
        kernel,
        out_shape=jax.ShapeDtypeStruct((Bp, C), jnp.float32),
        grid=(pl.cdiv(Bp, tb),),
        in_specs=[
            pl.BlockSpec((tb, Dx), lambda i: (i, 0)),   # x batch tile
            full((C, H)),                               # hy (precomputed, grid-invariant)
            full((Dx, H)), full((1, H)),                # FD NN1
            full((H, H)), full((1, H)),                 # FD output MLP
            full((C, H)), full((1, C)),                 # grouped conv weight / bias
        ],
        out_specs=pl.BlockSpec((tb, C), lambda i: (i, 0)),
        compiler_params=pltpu.CompilerParams(
            dimension_semantics=("parallel",),          # megacore-sharded batch axis
            vmem_limit_bytes=48 * 1024 * 1024),         # < 64 MiB v7x physical VMEM
    )(x, hy, p["fd_w1"], p["fd_b1"], p["fd_w3"], p["fd_b3"],
      p["conv_w"], p["conv_b"])
    return out[:B]


# ---------------------------- full forward pass ------------------------------
def clif_forward(x, p, *, tile_b=128, mxu_dtype=jnp.float32):
    label_emb, hy = gin_hy_forward(p["label_emb"], p["label_edge"],
                                   p["gin_w0"], p["gin_b0"],
                                   p["gin_w1"], p["gin_b1"],
                                   p["fd_w2"], p["fd_b2"])
    out = fd_cls_forward(x, hy, p, tile_b=tile_b, mxu_dtype=mxu_dtype)
    return out, label_emb


def clif_reference(x, p):
    """Pure-JAX reference (mirrors the PyTorch forward)."""
    h, adj = p["label_emb"], p["label_edge"]
    agg = (1.0 + GIN_EPS) * h + adj @ h
    h1 = _lrelu(agg @ p["gin_w0"] + p["gin_b0"])
    agg = (1.0 + GIN_EPS) * h1 + adj @ h1
    h2 = _lrelu(agg @ p["gin_w1"] + p["gin_b1"]) + h1
    hx = _lrelu(x @ p["fd_w1"] + p["fd_b1"])
    hy = _lrelu(h2 @ p["fd_w2"] + p["fd_b2"])
    z = hx[:, None, :] * hy[None, :, :]
    t = _lrelu(jnp.einsum("bch,hk->bck", z, p["fd_w3"]) + p["fd_b3"])
    out = jnp.sum(t * p["conv_w"][None], axis=-1) + p["conv_b"]
    return out, h2


def init_params(key, *, num_classes, input_x_size, class_emb_size,
                gin_hidden, hidden):
    ks = jax.random.split(key, 11)
    w = lambda k, shape, s: (s * jax.random.normal(k, shape)).astype(jnp.float32)
    return {
        "label_emb": jax.random.normal(ks[0], (num_classes, num_classes),
                                       jnp.float32),               # nn.init.normal_
        "label_edge": jnp.eye(num_classes, dtype=jnp.float32),
        "gin_w0": w(ks[1], (num_classes, gin_hidden), 0.3),
        "gin_b0": jnp.zeros((gin_hidden,), jnp.float32),
        "gin_w1": w(ks[2], (gin_hidden, class_emb_size), 0.3),
        "gin_b1": jnp.zeros((class_emb_size,), jnp.float32),
        "fd_w1": w(ks[3], (input_x_size, hidden), 0.1),
        "fd_b1": w(ks[4], (1, hidden), 0.05),
        "fd_w2": w(ks[5], (class_emb_size, hidden), 0.1),
        "fd_b2": w(ks[6], (1, hidden), 0.05),
        "fd_w3": w(ks[7], (hidden, hidden), 0.05),
        "fd_b3": w(ks[8], (1, hidden), 0.05),
        "conv_w": w(ks[9], (num_classes, hidden), 0.05),   # Conv1d weight [C,1,H] -> [C,H]
        "conv_b": w(ks[10], (1, num_classes), 0.05),
    }


if __name__ == "__main__":
    cfg = dict(num_classes=8, input_x_size=32, class_emb_size=16,
               gin_hidden=16, hidden=768)  # hidden=768 hard-coded in the module
    B = 12  # non-multiple of 8 to exercise the cdiv + pad/slice path
    key = jax.random.PRNGKey(0)
    pkey, xkey = jax.random.split(key)
    params = init_params(pkey, **cfg)
    x = jax.random.normal(xkey, (B, cfg["input_x_size"]), jnp.float32)

    ref_out, ref_emb = clif_reference(x, params)

    # f32 MXU path (exact parity with the reference).
    out, label_emb = clif_forward(x, params)
    jax.block_until_ready(out)
    jax.block_until_ready(label_emb)
    assert out.shape == (B, cfg["num_classes"])
    assert label_emb.shape == (cfg["num_classes"], cfg["class_emb_size"])
    assert jnp.allclose(out, ref_out, rtol=1e-3, atol=1e-3)
    assert jnp.allclose(label_emb, ref_emb, rtol=1e-3, atol=1e-3)

    # bf16-operand MXU path (v6e/v7x fast path, f32 accumulation) — looser tolerance.
    out_bf16, _ = clif_forward(x, params, mxu_dtype=jnp.bfloat16)
    jax.block_until_ready(out_bf16)
    assert jnp.allclose(out_bf16, ref_out, rtol=2e-2, atol=2e-2)

    print("KERNEL_OK")
</pallas_src>

<mosaic_0001>
module attributes {stable_mosaic.version = 11 : i64} {
  func.func @gin_hy_kernel(%arg0: memref<8x8xf32, #tpu.memory_space<vmem>>, %arg1: memref<8x8xf32, #tpu.memory_space<vmem>>, %arg2: memref<8x16xf32, #tpu.memory_space<vmem>>, %arg3: memref<1x16xf32, #tpu.memory_space<vmem>>, %arg4: memref<16x16xf32, #tpu.memory_space<vmem>>, %arg5: memref<1x16xf32, #tpu.memory_space<vmem>>, %arg6: memref<16x768xf32, #tpu.memory_space<vmem>>, %arg7: memref<1x768xf32, #tpu.memory_space<vmem>>, %arg8: memref<8x16xf32, #tpu.memory_space<vmem>>, %arg9: memref<8x768xf32, #tpu.memory_space<vmem>>) attributes {dimension_semantics = [], scalar_prefetch = 0 : i64, scratch_operands = 0 : i64, tpu.core_type = #tpu.core_type<tc>} {
    %c0 = arith.constant 0 : index
    %c0_0 = arith.constant 0 : index
    %0 = vector.load %arg0[%c0, %c0_0] : memref<8x8xf32, #tpu.memory_space<vmem>>, vector<8x8xf32>
    %c0_1 = arith.constant 0 : index
    %c0_2 = arith.constant 0 : index
    %1 = vector.load %arg1[%c0_1, %c0_2] : memref<8x8xf32, #tpu.memory_space<vmem>>, vector<8x8xf32>
    %cst = arith.constant 1.000000e+00 : f32
    %2 = vector.broadcast %cst : f32 to vector<8x8xf32>
    %3 = arith.mulf %2, %0 : vector<8x8xf32>
    %cst_3 = arith.constant dense<0.000000e+00> : vector<8x8xf32>
    %4 = tpu.matmul %1, %0, %cst_3 {dimension_numbers = #tpu.dot_dimension_numbers<[1], [0], [0], [1], [0, 0, 1, 1], [], []>} : vector<8x8xf32>, vector<8x8xf32>, vector<8x8xf32> -> vector<8x8xf32>
    %5 = arith.addf %3, %4 : vector<8x8xf32>
    %c0_4 = arith.constant 0 : index
    %c0_5 = arith.constant 0 : index
    %6 = vector.load %arg2[%c0_4, %c0_5] : memref<8x16xf32, #tpu.memory_space<vmem>>, vector<8x16xf32>
    %cst_6 = arith.constant dense<0.000000e+00> : vector<8x16xf32>
    %7 = tpu.matmul %5, %6, %cst_6 {dimension_numbers = #tpu.dot_dimension_numbers<[1], [0], [0], [1], [0, 0, 1, 1], [], []>} : vector<8x8xf32>, vector<8x16xf32>, vector<8x16xf32> -> vector<8x16xf32>
    %c0_7 = arith.constant 0 : index
    %c0_8 = arith.constant 0 : index
    %8 = vector.load %arg3[%c0_7, %c0_8] : memref<1x16xf32, #tpu.memory_space<vmem>>, vector<1x16xf32>
    %9 = vector.broadcast %8 : vector<1x16xf32> to vector<8x16xf32>
    %10 = arith.addf %7, %9 : vector<8x16xf32>
    %cst_9 = arith.constant 0.000000e+00 : f32
    %11 = vector.broadcast %cst_9 : f32 to vector<8x16xf32>
    %12 = arith.cmpf oge, %10, %11 : vector<8x16xf32>
    %cst_10 = arith.constant 1.000000e-01 : f32
    %13 = vector.broadcast %cst_10 : f32 to vector<8x16xf32>
    %14 = arith.mulf %13, %10 : vector<8x16xf32>
    %15 = arith.select %12, %10, %14 : vector<8x16xi1>, vector<8x16xf32>
    %cst_11 = arith.constant 1.000000e+00 : f32
    %16 = vector.broadcast %cst_11 : f32 to vector<8x16xf32>
    %17 = arith.mulf %16, %15 : vector<8x16xf32>
    %cst_12 = arith.constant dense<0.000000e+00> : vector<8x16xf32>
    %18 = tpu.matmul %1, %15, %cst_12 {dimension_numbers = #tpu.dot_dimension_numbers<[1], [0], [0], [1], [0, 0, 1, 1], [], []>} : vector<8x8xf32>, vector<8x16xf32>, vector<8x16xf32> -> vector<8x16xf32>
    %19 = arith.addf %17, %18 : vector<8x16xf32>
    %c0_13 = arith.constant 0 : index
    %c0_14 = arith.constant 0 : index
    %20 = vector.load %arg4[%c0_13, %c0_14] : memref<16x16xf32, #tpu.memory_space<vmem>>, vector<16x16xf32>
    %cst_15 = arith.constant dense<0.000000e+00> : vector<8x16xf32>
    %21 = tpu.matmul %19, %20, %cst_15 {dimension_numbers = #tpu.dot_dimension_numbers<[1], [0], [0], [1], [0, 0, 1, 1], [], []>} : vector<8x16xf32>, vector<16x16xf32>, vector<8x16xf32> -> vector<8x16xf32>
    %c0_16 = arith.constant 0 : index
    %c0_17 = arith.constant 0 : index
    %22 = vector.load %arg5[%c0_16, %c0_17] : memref<1x16xf32, #tpu.memory_space<vmem>>, vector<1x16xf32>
    %23 = vector.broadcast %22 : vector<1x16xf32> to vector<8x16xf32>
    %24 = arith.addf %21, %23 : vector<8x16xf32>
    %cst_18 = arith.constant 0.000000e+00 : f32
    %25 = vector.broadcast %cst_18 : f32 to vector<8x16xf32>
    %26 = arith.cmpf oge, %24, %25 : vector<8x16xf32>
    %cst_19 = arith.constant 1.000000e-01 : f32
    %27 = vector.broadcast %cst_19 : f32 to vector<8x16xf32>
    %28 = arith.mulf %27, %24 : vector<8x16xf32>
    %29 = arith.select %26, %24, %28 : vector<8x16xi1>, vector<8x16xf32>
    %30 = arith.addf %29, %15 : vector<8x16xf32>
    %c0_20 = arith.constant 0 : index
    %c0_21 = arith.constant 0 : index
    %31 = vector.load %arg8[%c0_20, %c0_21] : memref<8x16xf32, #tpu.memory_space<vmem>>, vector<8x16xf32>
    tpu.vector_store %arg8[%c0_20, %c0_21], %30 {strides = array<i32>} : memref<8x16xf32, #tpu.memory_space<vmem>>, vector<8x16xf32>,
    %c0_22 = arith.constant 0 : index
    %c0_23 = arith.constant 0 : index
    %32 = vector.load %arg6[%c0_22, %c0_23] : memref<16x768xf32, #tpu.memory_space<vmem>>, vector<16x768xf32>
    %cst_24 = arith.constant dense<0.000000e+00> : vector<8x768xf32>
    %33 = tpu.matmul %30, %32, %cst_24 {dimension_numbers = #tpu.dot_dimension_numbers<[1], [0], [0], [1], [0, 0, 1, 1], [], []>} : vector<8x16xf32>, vector<16x768xf32>, vector<8x768xf32> -> vector<8x768xf32>
    %c0_25 = arith.constant 0 : index
    %c0_26 = arith.constant 0 : index
    %34 = vector.load %arg7[%c0_25, %c0_26] : memref<1x768xf32, #tpu.memory_space<vmem>>, vector<1x768xf32>
    %35 = vector.broadcast %34 : vector<1x768xf32> to vector<8x768xf32>
    %36 = arith.addf %33, %35 : vector<8x768xf32>
    %cst_27 = arith.constant 0.000000e+00 : f32
    %37 = vector.broadcast %cst_27 : f32 to vector<8x768xf32>
    %38 = arith.cmpf oge, %36, %37 : vector<8x768xf32>
    %cst_28 = arith.constant 1.000000e-01 : f32
    %39 = vector.broadcast %cst_28 : f32 to vector<8x768xf32>
    %40 = arith.mulf %39, %36 : vector<8x768xf32>
    %41 = arith.select %38, %36, %40 : vector<8x768xi1>, vector<8x768xf32>
    %c0_29 = arith.constant 0 : index
    %c0_30 = arith.constant 0 : index
    %42 = vector.load %arg9[%c0_29, %c0_30] : memref<8x768xf32, #tpu.memory_space<vmem>>, vector<8x768xf32>
    tpu.vector_store %arg9[%c0_29, %c0_30], %41 {strides = array<i32>} : memref<8x768xf32, #tpu.memory_space<vmem>>, vector<8x768xf32>,
    return
  }
}

</mosaic_0001>

<llo_original>
// kernel: tpu_custom_call.1
$region0: #{tpu_custom_call.1}
  #allocation0 [shape = 'u32[]', space=smem, size = 0x4, offset = 0x4, fixed_abs, tag = 'smem constant byte address 0x4 - core index']
  #allocation1 [shape = 'u32[144,128]{1,0:T(1,128)}', space=vmem, size = 0x12000, scoped, tag = 'internal scratch']
  %s0 = inlined_call_operand.hbm [shape: f32[8,8], index: 0, kind: input, shape index: {}]
  %s1 = inlined_call_operand.hbm [shape: f32[8,8], index: 1, kind: input, shape index: {}]
  %s2 = inlined_call_operand.hbm [shape: f32[8,16], index: 2, kind: input, shape index: {}]
  %s3 = inlined_call_operand.vmem [shape: f32[1,16], index: 3, kind: input, shape index: {}]
  %s4 = inlined_call_operand.hbm [shape: f32[16,16], index: 4, kind: input, shape index: {}]
  %s5 = inlined_call_operand.vmem [shape: f32[1,16], index: 5, kind: input, shape index: {}]
  %s6 = inlined_call_operand.hbm [shape: f32[16,768], index: 6, kind: input, shape index: {}]
  %s7 = inlined_call_operand.vmem [shape: f32[1,768], index: 7, kind: input, shape index: {}]
  %s8 = inlined_call_operand.hbm [shape: f32[8,16], index: 8, kind: output, shape index: {0}]
  %s9 = inlined_call_operand.hbm [shape: f32[8,768], index: 9, kind: output, shape index: {1}]
  %10 = xla_tuple %s8, %s9
  %s11 = sld [smem:[#allocation0]]
  $region70: #{tpu_custom_call.1} parent=0
    _
  %s13 = ssub.s32 1, %s11
  %s14 = scalar_select 0, %s13, %s11
  $region1: #{tpu_custom_call.1} parent=0
    #allocation2 [shape = 'u8[4096]{0}', space=vmem, size = 0x1000, scoped, tag = 'input window, operand 0, single buffered']
    #allocation3 [shape = 's32[1]{0}', space=sflag, size = 0x4, scoped, tag = 'scoped memory for tpu_custom_call.1']
    #allocation4 [shape = 's32[1]{0}', space=sflag, size = 0x4, scoped, tag = 'scoped memory for tpu_custom_call.1']
    #allocation5 [shape = 'u8[4096]{0}', space=vmem, size = 0x1000, scoped, tag = 'input window, operand 1, single buffered']
    #allocation6 [shape = 's32[1]{0}', space=sflag, size = 0x4, scoped, tag = 'scoped memory for tpu_custom_call.1']
    #allocation7 [shape = 'u8[4096]{0}', space=vmem, size = 0x1000, scoped, tag = 'input window, operand 2, single buffered']
    #allocation8 [shape = 'u8[8192]{0}', space=vmem, size = 0x2000, scoped, tag = 'input window, operand 4, single buffered']
    #allocation9 [shape = 's32[1]{0}', space=sflag, size = 0x4, scoped, tag = 'scoped memory for tpu_custom_call.1']
    #allocation10 [shape = 'u8[49152]{0}', space=vmem, size = 0xc000, scoped, tag = 'input window, operand 6, single buffered']
    #allocation11 [shape = 'u8[4096]{0}', space=vmem, size = 0x1000, scoped, tag = 'output window, operand 0, single buffered']
    #allocation12 [shape = 'u8[24576]{0}', space=vmem, size = 0x6000, scoped, tag = 'output window, operand 1, single buffered']
    #allocation13 [shape = 's32[1]{0}', space=sflag, size = 0x4, scoped, tag = 'scoped memory for tpu_custom_call.1']
    %15 = vsyncpa [#allocation3], 0
    %16 = vsyncpa [#allocation6], 0
    %17 = vsyncpa [#allocation9], 0
    %18 = vsyncpa [#allocation4], 0
    %19 = vsyncpa [#allocation13], 0
    // Predicated region
    $region2: #{tpu_custom_call.1} parent=1 // pred_check
      _
    $region3: #{tpu_custom_call.1} parent=1 // pred_check_branch
      %21 = sbr.rel (0) target = $region5
    $region4: #{tpu_custom_call.1} parent=1 // pred_region
      %s23 = ssub.s32 128, 128
      %24 = vsyncadd [#allocation3], %s23
      %s26 = sshll.u32 [#allocation2], 4
      %s27 = int_to_ptr.vmem [resolvable:$true] %s26
      %29 = dma.hbm_to_vmem [thread:$0]  %s0, 128, %s27, [#allocation3]
    $region5: #{tpu_custom_call.1} parent=1 // pred_fallthru
      _
    // Predicated region
    $region6: #{tpu_custom_call.1} parent=1 // pred_check
      _
    $region7: #{tpu_custom_call.1} parent=1 // pred_check_branch
      %31 = sbr.rel (0) target = $region9
    $region8: #{tpu_custom_call.1} parent=1 // pred_region
      %s33 = ssub.s32 128, 128
      %34 = vsyncadd [#allocation6], %s33
      %s36 = sshll.u32 [#allocation5], 4
      %s37 = int_to_ptr.vmem [resolvable:$true] %s36
      %39 = dma.hbm_to_vmem [thread:$0]  %s1, 128, %s37, [#allocation6]
    $region9: #{tpu_custom_call.1} parent=1 // pred_fallthru
      _
    // Predicated region
    $region10: #{tpu_custom_call.1} parent=1 // pred_check
      _
    $region11: #{tpu_custom_call.1} parent=1 // pred_check_branch
      %41 = sbr.rel (0) target = $region13
    $region12: #{tpu_custom_call.1} parent=1 // pred_region
      %s43 = ssub.s32 128, 128
      %44 = vsyncadd [#allocation6], %s43
      %s46 = sshll.u32 [#allocation7], 4
      %s47 = int_to_ptr.vmem [resolvable:$true] %s46
      %49 = dma.hbm_to_vmem [thread:$0]  %s2, 128, %s47, [#allocation6]
    $region13: #{tpu_custom_call.1} parent=1 // pred_fallthru
      _
    // Predicated region
    $region14: #{tpu_custom_call.1} parent=1 // pred_check
      _
    $region15: #{tpu_custom_call.1} parent=1 // pred_check_branch
      %51 = sbr.rel (0) target = $region17
    $region16: #{tpu_custom_call.1} parent=1 // pred_region
      _
    $region17: #{tpu_custom_call.1} parent=1 // pred_fallthru
      _
    // Predicated region
    $region18: #{tpu_custom_call.1} parent=1 // pred_check
      _
    $region19: #{tpu_custom_call.1} parent=1 // pred_check_branch
      %53 = sbr.rel (0) target = $region21
    $region20: #{tpu_custom_call.1} parent=1 // pred_region
      %s55 = ssub.s32 256, 256
      %56 = vsyncadd [#allocation9], %s55
      %s57 = sshll.u32 [#allocation8], 4
      %s58 = int_to_ptr.vmem [resolvable:$true] %s57
      %63 = dma.hbm_to_vmem [thread:$0]  %s4, 256, %s58, [#allocation9], 128, 128, 8
    $region21: #{tpu_custom_call.1} parent=1 // pred_fallthru
      _
    // Predicated region
    $region22: #{tpu_custom_call.1} parent=1 // pred_check
      _
    $region23: #{tpu_custom_call.1} parent=1 // pred_check_branch
      %65 = sbr.rel (0) target = $region25
    $region24: #{tpu_custom_call.1} parent=1 // pred_region
      _
    $region25: #{tpu_custom_call.1} parent=1 // pred_fallthru
      _
    // Predicated region
    $region26: #{tpu_custom_call.1} parent=1 // pred_check
      _
    $region27: #{tpu_custom_call.1} parent=1 // pred_check_branch
      %67 = sbr.rel (0) target = $region29
    $region28: #{tpu_custom_call.1} parent=1 // pred_region
      %s69 = ssub.s32 1536, 1536
      %70 = vsyncadd [#allocation9], %s69
      %s71 = sshll.u32 [#allocation10], 4
      %s72 = int_to_ptr.vmem [resolvable:$true] %s71
      %77 = dma.hbm_to_vmem [thread:$0]  %s6, 1536, %s72, [#allocation9], 768, 768, 48
    $region29: #{tpu_custom_call.1} parent=1 // pred_fallthru
      _
    // Predicated region
    $region30: #{tpu_custom_call.1} parent=1 // pred_check
      _
    $region31: #{tpu_custom_call.1} parent=1 // pred_check_branch
      %79 = sbr.rel (0) target = $region33
    $region32: #{tpu_custom_call.1} parent=1 // pred_region
      _
    $region33: #{tpu_custom_call.1} parent=1 // pred_fallthru
      _
    // Predicated region
    $region34: #{tpu_custom_call.1} parent=1 // pred_check
      _
    $region35: #{tpu_custom_call.1} parent=1 // pred_check_branch
      %81 = sbr.rel (0) target = $region37
    $region36: #{tpu_custom_call.1} parent=1 // pred_region
      %82 = dma.done [#allocation3], 128
    $region37: #{tpu_custom_call.1} parent=1 // pred_fallthru
      _
    // Predicated region
    $region38: #{tpu_custom_call.1} parent=1 // pred_check
      _
    $region39: #{tpu_custom_call.1} parent=1 // pred_check_branch
      %84 = sbr.rel (0) target = $region41
    $region40: #{tpu_custom_call.1} parent=1 // pred_region
      %85 = dma.done [#allocation6], 128
    $region41: #{tpu_custom_call.1} parent=1 // pred_fallthru
      _
    // Predicated region
    $region42: #{tpu_custom_call.1} parent=1 // pred_check
      _
    $region43: #{tpu_custom_call.1} parent=1 // pred_check_branch
      %87 = sbr.rel (0) target = $region45
    $region44: #{tpu_custom_call.1} parent=1 // pred_region
      %88 = dma.done [#allocation6], 128
    $region45: #{tpu_custom_call.1} parent=1 // pred_fallthru
      _
    // Predicated region
    $region46: #{tpu_custom_call.1} parent=1 // pred_check
      _
    $region47: #{tpu_custom_call.1} parent=1 // pred_check_branch
      %90 = sbr.rel (0) target = $region49
    $region48: #{tpu_custom_call.1} parent=1 // pred_region
      %91 = dma.done [#allocation9], 256
    $region49: #{tpu_custom_call.1} parent=1 // pred_fallthru
      _
    // Predicated region
    $region50: #{tpu_custom_call.1} parent=1 // pred_check
      _
    $region51: #{tpu_custom_call.1} parent=1 // pred_check_branch
      %93 = sbr.rel (0) target = $region53
    $region52: #{tpu_custom_call.1} parent=1 // pred_region
      %94 = dma.done [#allocation9], 1536
    $region53: #{tpu_custom_call.1} parent=1 // pred_fallthru
      _
    %v95 = vld [vmem:[#allocation2] sm:$0xff]
    %v96 = vld [vmem:[#allocation5] sm:$0xff]
    %vm97 = vcmask 64512
    %v99 = vsel %vm97, %v96, 0
    %101 = vmatprep.subr.mxu0 0.0
    %102 = vmatpush1.msra.mxu0 %v95
    %103 = vmatprep.subr.mxu0 0.0
    %104 = vmatpush1.msra.mxu0 0.0
    %105 = vmatprep.subr.mxu0 0.0
    %106 = vmatpush1.msra.mxu0 0.0
    %107 = vmatprep.subr.mxu0 0.0
    %108 = vmatpush1.msra.mxu0 0.0
    %109 = vmatprep.subr.mxu0 0.0
    %110 = vmatpush1.msra.mxu0 0.0
    %111 = vmatprep.subr.mxu0 0.0
    %112 = vmatpush1.msra.mxu0 0.0
    %113 = vmatprep.subr.mxu0 0.0
    %114 = vmatpush1.msra.mxu0 0.0
    %115 = vmatprep.subr.mxu0 0.0
    %116 = vmatpush1.msra.mxu0 0.0
    %117 = vmatprep.subr.mxu0 0.0
    %118 = vmatpush1.msra.mxu0 0.0
    %119 = vmatprep.subr.mxu0 0.0
    %120 = vmatpush1.msra.mxu0 0.0
    %121 = vmatprep.subr.mxu0 0.0
    %122 = vmatpush1.msra.mxu0 0.0
    %123 = vmatprep.subr.mxu0 0.0
    %124 = vmatpush1.msra.mxu0 0.0
    %125 = vmatprep.subr.mxu0 0.0
    %126 = vmatpush1.msra.mxu0 0.0
    %127 = vmatprep.subr.mxu0 0.0
    %128 = vmatpush1.msra.mxu0 0.0
    %129 = vmatprep.subr.mxu0 0.0
    %130 = vmatpush1.msra.mxu0 0.0
    %131 = vmatprep.subr.mxu0 0.0
    %132 = vmatpush1.msra.mxu0 0.0
    %133 = vmatprep.subr.mxu0 0.0
    %134 = vmatpush1.msra.mxu0 0.0
    %135 = vmatprep.subr.mxu0 0.0
    %136 = vmatpush1.msra.mxu0 0.0
    %137 = vmatprep.subr.mxu0 0.0
    %138 = vmatpush1.msra.mxu0 0.0
    %139 = vmatprep.subr.mxu0 0.0
    %140 = vmatpush1.msra.mxu0 0.0
    %141 = vmatprep.subr.mxu0 0.0
    %142 = vmatpush1.msra.mxu0 0.0
    %143 = vmatprep.subr.mxu0 0.0
    %144 = vmatpush1.msra.mxu0 0.0
    %145 = vmatprep.subr.mxu0 0.0
    %146 = vmatpush1.msra.mxu0 0.0
    %147 = vmatprep.subr.mxu0 0.0
    %148 = vmatpush1.msra.mxu0 0.0
    %149 = vmatprep.subr.mxu0 0.0
    %150 = vmatpush1.msra.mxu0 0.0
    %151 = vmatprep.subr.mxu0 0.0
    %152 = vmatpush1.msra.mxu0 0.0
    %153 = vmatprep.subr.mxu0 0.0
    %154 = vmatpush1.msra.mxu0 0.0
    %155 = vmatprep.subr.mxu0 0.0
    %156 = vmatpush1.msra.mxu0 0.0
    %157 = vmatprep.subr.mxu0 0.0
    %158 = vmatpush1.msra.mxu0 0.0
    %159 = vmatprep.subr.mxu0 0.0
    %160 = vmatpush1.msra.mxu0 0.0
    %161 = vmatprep.subr.mxu0 0.0
    %162 = vmatpush1.msra.mxu0 0.0
    %163 = vmatprep.subr.mxu0 0.0
    %164 = vmatpush1.msra.mxu0 0.0
    %165 = vmatprep.mubr.f32.mxu0 0.0
    %166 = vmatmul.mubr.f32.gmra.mrb[0].mxu0 %v99
    %v167 = vpop.f32.mrb[0].mxu0
    %v168 = vadd.f32 0.0, %v167
    %v169 = vpop.f32.mrb[0].mxu0
    %170 = vdwg.mxu0
    %v171 = vadd.f32 %v95, %v168
    %v172 = vld [vmem:[#allocation7] sm:$0xff]
    %v173 = vld [vmem:[%s3] sm:$0x1]
    %v175 = vlaneseq
    %v176 = vshrl.u32 %v175, 7
    %v177 = vsub.s32 0, %v176
    %v178 = vrot.slane %v173, %v177
    %v181 = vsel %vm97, %v171, 0
    %183 = vmatprep.subr.mxu0 0.0
    %184 = vmatpush1.msra.mxu0 %v172
    %185 = vmatprep.subr.mxu0 0.0
    %186 = vmatpush1.msra.mxu0 0.0
    %187 = vmatprep.subr.mxu0 0.0
    %188 = vmatpush1.msra.mxu0 0.0
    %189 = vmatprep.subr.mxu0 0.0
    %190 = vmatpush1.msra.mxu0 0.0
    %191 = vmatprep.subr.mxu0 0.0
    %192 = vmatpush1.msra.mxu0 0.0
    %193 = vmatprep.subr.mxu0 0.0
    %194 = vmatpush1.msra.mxu0 0.0
    %195 = vmatprep.subr.mxu0 0.0
    %196 = vmatpush1.msra.mxu0 0.0
    %197 = vmatprep.subr.mxu0 0.0
    %198 = vmatpush1.msra.mxu0 0.0
    %199 = vmatprep.subr.mxu0 0.0
    %200 = vmatpush1.msra.mxu0 0.0
    %201 = vmatprep.subr.mxu0 0.0
    %202 = vmatpush1.msra.mxu0 0.0
    %203 = vmatprep.subr.mxu0 0.0
    %204 = vmatpush1.msra.mxu0 0.0
    %205 = vmatprep.subr.mxu0 0.0
    %206 = vmatpush1.msra.mxu0 0.0
    %207 = vmatprep.subr.mxu0 0.0
    %208 = vmatpush1.msra.mxu0 0.0
    %209 = vmatprep.subr.mxu0 0.0
    %210 = vmatpush1.msra.mxu0 0.0
    %211 = vmatprep.subr.mxu0 0.0
    %212 = vmatpush1.msra.mxu0 0.0
    %213 = vmatprep.subr.mxu0 0.0
    %214 = vmatpush1.msra.mxu0 0.0
    %215 = vmatprep.subr.mxu0 0.0
    %216 = vmatpush1.msra.mxu0 0.0
    %217 = vmatprep.subr.mxu0 0.0
    %218 = vmatpush1.msra.mxu0 0.0
    %219 = vmatprep.subr.mxu0 0.0
    %220 = vmatpush1.msra.mxu0 0.0
    %221 = vmatprep.subr.mxu0 0.0
    %222 = vmatpush1.msra.mxu0 0.0
    %223 = vmatprep.subr.mxu0 0.0
    %224 = vmatpush1.msra.mxu0 0.0
    %225 = vmatprep.subr.mxu0 0.0
    %226 = vmatpush1.msra.mxu0 0.0
    %227 = vmatprep.subr.mxu0 0.0
    %228 = vmatpush1.msra.mxu0 0.0
    %229 = vmatprep.subr.mxu0 0.0
    %230 = vmatpush1.msra.mxu0 0.0
    %231 = vmatprep.subr.mxu0 0.0
    %232 = vmatpush1.msra.mxu0 0.0
    %233 = vmatprep.subr.mxu0 0.0
    %234 = vmatpush1.msra.mxu0 0.0
    %235 = vmatprep.subr.mxu0 0.0
    %236 = vmatpush1.msra.mxu0 0.0
    %237 = vmatprep.subr.mxu0 0.0
    %238 = vmatpush1.msra.mxu0 0.0
    %239 = vmatprep.subr.mxu0 0.0
    %240 = vmatpush1.msra.mxu0 0.0
    %241 = vmatprep.subr.mxu0 0.0
    %242 = vmatpush1.msra.mxu0 0.0
    %243 = vmatprep.subr.mxu0 0.0
    %244 = vmatpush1.msra.mxu0 0.0
    %245 = vmatprep.subr.mxu0 0.0
    %246 = vmatpush1.msra.mxu0 0.0
    %247 = vmatprep.mubr.f32.mxu0 0.0
    %248 = vmatmul.mubr.f32.gmra.mrb[0].mxu0 %v181
    %v249 = vpop.f32.mrb[0].mxu0
    %v250 = vadd.f32 %v178, %v249
    %v251 = vpop.f32.mrb[0].mxu0
    %252 = vdwg.mxu0
    %vm253 = vcmp.ge.f32.partialorder %v250, 0.0
    %v254 = vmul.f32 %v250, 0.1
    %v255 = vsel %vm253, %v250, %v254
    %256 = vmatprep.subr.mxu0 0.0
    %257 = vmatpush1.msra.mxu0 %v255
    %258 = vmatprep.subr.mxu0 0.0
    %259 = vmatpush1.msra.mxu0 0.0
    %260 = vmatprep.subr.mxu0 0.0
    %261 = vmatpush1.msra.mxu0 0.0
    %262 = vmatprep.subr.mxu0 0.0
    %263 = vmatpush1.msra.mxu0 0.0
    %264 = vmatprep.subr.mxu0 0.0
    %265 = vmatpush1.msra.mxu0 0.0
    %266 = vmatprep.subr.mxu0 0.0
    %267 = vmatpush1.msra.mxu0 0.0
    %268 = vmatprep.subr.mxu0 0.0
    %269 = vmatpush1.msra.mxu0 0.0
    %270 = vmatprep.subr.mxu0 0.0
    %271 = vmatpush1.msra.mxu0 0.0
    %272 = vmatprep.subr.mxu0 0.0
    %273 = vmatpush1.msra.mxu0 0.0
    %274 = vmatprep.subr.mxu0 0.0
    %275 = vmatpush1.msra.mxu0 0.0
    %276 = vmatprep.subr.mxu0 0.0
    %277 = vmatpush1.msra.mxu0 0.0
    %278 = vmatprep.subr.mxu0 0.0
    %279 = vmatpush1.msra.mxu0 0.0
    %280 = vmatprep.subr.mxu0 0.0
    %281 = vmatpush1.msra.mxu0 0.0
    %282 = vmatprep.subr.mxu0 0.0
    %283 = vmatpush1.msra.mxu0 0.0
    %284 = vmatprep.subr.mxu0 0.0
    %285 = vmatpush1.msra.mxu0 0.0
    %286 = vmatprep.subr.mxu0 0.0
    %287 = vmatpush1.msra.mxu0 0.0
    %288 = vmatprep.subr.mxu0 0.0
    %289 = vmatpush1.msra.mxu0 0.0
    %290 = vmatprep.subr.mxu0 0.0
    %291 = vmatpush1.msra.mxu0 0.0
    %292 = vmatprep.subr.mxu0 0.0
    %293 = vmatpush1.msra.mxu0 0.0
    %294 = vmatprep.subr.mxu0 0.0
    %295 = vmatpush1.msra.mxu0 0.0
    %296 = vmatprep.subr.mxu0 0.0
    %297 = vmatpush1.msra.mxu0 0.0
    %298 = vmatprep.subr.mxu0 0.0
    %299 = vmatpush1.msra.mxu0 0.0
    %300 = vmatprep.subr.mxu0 0.0
    %301 = vmatpush1.msra.mxu0 0.0
    %302 = vmatprep.subr.mxu0 0.0
    %303 = vmatpush1.msra.mxu0 0.0
    %304 = vmatprep.subr.mxu0 0.0
    %305 = vmatpush1.msra.mxu0 0.0
    %306 = vmatprep.subr.mxu0 0.0
    %307 = vmatpush1.msra.mxu0 0.0
    %308 = vmatprep.subr.mxu0 0.0
    %309 = vmatpush1.msra.mxu0 0.0
    %310 = vmatprep.subr.mxu0 0.0
    %311 = vmatpush1.msra.mxu0 0.0
    %312 = vmatprep.subr.mxu0 0.0
    %313 = vmatpush1.msra.mxu0 0.0
    %314 = vmatprep.subr.mxu0 0.0
    %315 = vmatpush1.msra.mxu0 0.0
    %316 = vmatprep.subr.mxu0 0.0
    %317 = vmatpush1.msra.mxu0 0.0
    %318 = vmatprep.subr.mxu0 0.0
    %319 = vmatpush1.msra.mxu0 0.0
    %320 = vmatprep.mubr.f32.mxu0 0.0
    %321 = vmatmul.mubr.f32.gmra.mrb[0].mxu0 %v99
    %v322 = vpop.f32.mrb[0].mxu0
    %v323 = vadd.f32 0.0, %v322
    %v324 = vpop.f32.mrb[0].mxu0
    %325 = vdwg.mxu0
    %v326 = vadd.f32 %v255, %v323
    %v327 = vld [vmem:[#allocation8] sm:$0xff]
    %v328 = vld [vmem:[#allocation8 + $0x8] sm:$0xff]
    %v329 = vld [vmem:[%s5] sm:$0x1]
    %v331 = vlaneseq
    %v332 = vshrl.u32 %v331, 7
    %v333 = vsub.s32 0, %v332
    %v334 = vrot.slane %v329, %v333
    %vm336 = vcmask 130048
    %v338 = vsel %vm336, %v326, 0
    %340 = vmatprep.subr.mxu0 0.0
    %341 = vmatpush1.msra.mxu0 %v327
    %342 = vmatprep.subr.mxu0 0.0
    %343 = vmatpush1.msra.mxu0 %v328
    %344 = vmatprep.subr.mxu0 0.0
    %345 = vmatpush1.msra.mxu0 0.0
    %346 = vmatprep.subr.mxu0 0.0
    %347 = vmatpush1.msra.mxu0 0.0
    %348 = vmatprep.subr.mxu0 0.0
    %349 = vmatpush1.msra.mxu0 0.0
    %350 = vmatprep.subr.mxu0 0.0
    %351 = vmatpush1.msra.mxu0 0.0
    %352 = vmatprep.subr.mxu0 0.0
    %353 = vmatpush1.msra.mxu0 0.0
    %354 = vmatprep.subr.mxu0 0.0
    %355 = vmatpush1.msra.mxu0 0.0
    %356 = vmatprep.subr.mxu0 0.0
    %357 = vmatpush1.msra.mxu0 0.0
    %358 = vmatprep.subr.mxu0 0.0
    %359 = vmatpush1.msra.mxu0 0.0
    %360 = vmatprep.subr.mxu0 0.0
    %361 = vmatpush1.msra.mxu0 0.0
    %362 = vmatprep.subr.mxu0 0.0
    %363 = vmatpush1.msra.mxu0 0.0
    %364 = vmatprep.subr.mxu0 0.0
    %365 = vmatpush1.msra.mxu0 0.0
    %366 = vmatprep.subr.mxu0 0.0
    %367 = vmatpush1.msra.mxu0 0.0
    %368 = vmatprep.subr.mxu0 0.0
    %369 = vmatpush1.msra.mxu0 0.0
    %370 = vmatprep.subr.mxu0 0.0
    %371 = vmatpush1.msra.mxu0 0.0
    %372 = vmatprep.subr.mxu0 0.0
    %373 = vmatpush1.msra.mxu0 0.0
    %374 = vmatprep.subr.mxu0 0.0
    %375 = vmatpush1.msra.mxu0 0.0
    %376 = vmatprep.subr.mxu0 0.0
    %377 = vmatpush1.msra.mxu0 0.0
    %378 = vmatprep.subr.mxu0 0.0
    %379 = vmatpush1.msra.mxu0 0.0
    %380 = vmatprep.subr.mxu0 0.0
    %381 = vmatpush1.msra.mxu0 0.0
    %382 = vmatprep.subr.mxu0 0.0
    %383 = vmatpush1.msra.mxu0 0.0
    %384 = vmatprep.subr.mxu0 0.0
    %385 = vmatpush1.msra.mxu0 0.0
    %386 = vmatprep.subr.mxu0 0.0
    %387 = vmatpush1.msra.mxu0 0.0
    %388 = vmatprep.subr.mxu0 0.0
    %389 = vmatpush1.msra.mxu0 0.0
    %390 = vmatprep.subr.mxu0 0.0
    %391 = vmatpush1.msra.mxu0 0.0
    %392 = vmatprep.subr.mxu0 0.0
    %393 = vmatpush1.msra.mxu0 0.0
    %394 = vmatprep.subr.mxu0 0.0
    %395 = vmatpush1.msra.mxu0 0.0
    %396 = vmatprep.subr.mxu0 0.0
    %397 = vmatpush1.msra.mxu0 0.0
    %398 = vmatprep.subr.mxu0 0.0
    %399 = vmatpush1.msra.mxu0 0.0
    %400 = vmatprep.subr.mxu0 0.0
    %401 = vmatpush1.msra.mxu0 0.0
    %402 = vmatprep.subr.mxu0 0.0
    %403 = vmatpush1.msra.mxu0 0.0
    %404 = vmatprep.mubr.f32.mxu0 0.0
    %405 = vmatmul.mubr.f32.gmra.mrb[0].mxu0 %v338
    %v406 = vpop.f32.mrb[0].mxu0
    %v407 = vadd.f32 %v334, %v406
    %v408 = vpop.f32.mrb[0].mxu0
    %409 = vdwg.mxu0
    %vm410 = vcmp.ge.f32.partialorder %v407, 0.0
    %v411 = vmul.f32 %v407, 0.1
    %v412 = vsel %vm410, %v407, %v411
    %v413 = vadd.f32 %v412, %v255
    %414 = vst.msk [vmem:[#allocation11] sm:$0xff] %vm336, %v413
    %v415 = vld [vmem:[#allocation10] sm:$0xff]
    %v416 = vld [vmem:[#allocation10 + $0x8] sm:$0xff]
    %v417 = vld [vmem:[#allocation10 + $0x10] sm:$0xff]
    %v418 = vld [vmem:[#allocation10 + $0x18] sm:$0xff]
    %v419 = vld [vmem:[#allocation10 + $0x20] sm:$0xff]
    %v420 = vld [vmem:[#allocation10 + $0x28] sm:$0xff]
    %v421 = vld [vmem:[#allocation10 + $0x30] sm:$0xff]
    %v422 = vld [vmem:[#allocation10 + $0x38] sm:$0xff]
    %v423 = vld [vmem:[#allocation10 + $0x40] sm:$0xff]
    %v424 = vld [vmem:[#allocation10 + $0x48] sm:$0xff]
    %v425 = vld [vmem:[#allocation10 + $0x50] sm:$0xff]
    %v426 = vld [vmem:[#allocation10 + $0x58] sm:$0xff]
    %v427 = vld [vmem:[%s7] sm:$0x3f]
    %v429 = vlaneseq
    %v430 = vshrl.u32 %v429, 7
    %v431 = vsub.s32 0, %v430
    %v432 = vrot.slane %v427, %v431
    %v433 = vlaneseq
    %v434 = vshrl.u32 %v433, 7
    %v435 = vsub.s32 1, %v434
    %v436 = vrot.slane %v427, %v435
    %v437 = vlaneseq
    %v438 = vshrl.u32 %v437, 7
    %v439 = vsub.s32 2, %v438
    %v440 = vrot.slane %v427, %v439
    %v441 = vlaneseq
    %v442 = vshrl.u32 %v441, 7
    %v443 = vsub.s32 3, %v442
    %v444 = vrot.slane %v427, %v443
    %v445 = vlaneseq
    %v446 = vshrl.u32 %v445, 7
    %v447 = vsub.s32 4, %v446
    %v448 = vrot.slane %v427, %v447
    %v449 = vlaneseq
    %v450 = vshrl.u32 %v449, 7
    %v451 = vsub.s32 5, %v450
    %v452 = vrot.slane %v427, %v451
    %v460 = vsel %vm336, %v413, 0
    %462 = vmatprep.subr.mxu0 %v416
    %463 = vmatpush1.msra.mxu0 %v415
    %464 = vmatprep.subr.mxu0 %v422
    %465 = vmatpush1.msra.mxu0 %v421
    %466 = vmatprep.subr.mxu0 0.0
    %467 = vmatpush1.msra.mxu0 0.0
    %468 = vmatprep.subr.mxu0 0.0
    %469 = vmatpush1.msra.mxu0 0.0
    %470 = vmatprep.subr.mxu0 0.0
    %471 = vmatpush1.msra.mxu0 0.0
    %472 = vmatprep.subr.mxu0 0.0
    %473 = vmatpush1.msra.mxu0 0.0
    %474 = vmatprep.subr.mxu0 0.0
    %475 = vmatpush1.msra.mxu0 0.0
    %476 = vmatprep.subr.mxu0 0.0
    %477 = vmatpush1.msra.mxu0 0.0
    %478 = vmatprep.subr.mxu0 0.0
    %479 = vmatpush1.msra.mxu0 0.0
    %480 = vmatprep.subr.mxu0 0.0
    %481 = vmatpush1.msra.mxu0 0.0
    %482 = vmatprep.subr.mxu0 0.0
    %483 = vmatpush1.msra.mxu0 0.0
    %484 = vmatprep.subr.mxu0 0.0
    %485 = vmatpush1.msra.mxu0 0.0
    %486 = vmatprep.subr.mxu0 0.0
    %487 = vmatpush1.msra.mxu0 0.0
    %488 = vmatprep.subr.mxu0 0.0
    %489 = vmatpush1.msra.mxu0 0.0
    %490 = vmatprep.subr.mxu0 0.0
    %491 = vmatpush1.msra.mxu0 0.0
    %492 = vmatprep.subr.mxu0 0.0
    %493 = vmatpush1.msra.mxu0 0.0
    %494 = vmatprep.subr.mxu0 0.0
    %495 = vmatpush1.msra.mxu0 0.0
    %496 = vmatprep.subr.mxu0 0.0
    %497 = vmatpush1.msra.mxu0 0.0
    %498 = vmatprep.subr.mxu0 0.0
    %499 = vmatpush1.msra.mxu0 0.0
    %500 = vmatprep.subr.mxu0 0.0
    %501 = vmatpush1.msra.mxu0 0.0
    %502 = vmatprep.subr.mxu0 0.0
    %503 = vmatpush1.msra.mxu0 0.0
    %504 = vmatprep.subr.mxu0 0.0
    %505 = vmatpush1.msra.mxu0 0.0
    %506 = vmatprep.subr.mxu0 0.0
    %507 = vmatpush1.msra.mxu0 0.0
    %508 = vmatprep.subr.mxu0 0.0
    %509 = vmatpush1.msra.mxu0 0.0
    %510 = vmatprep.subr.mxu0 0.0
    %511 = vmatpush1.msra.mxu0 0.0
    %512 = vmatprep.subr.mxu0 0.0
    %513 = vmatpush1.msra.mxu0 0.0
    %514 = vmatprep.subr.mxu0 0.0
    %515 = vmatpush1.msra.mxu0 0.0
    %516 = vmatprep.subr.mxu0 0.0
    %517 = vmatpush1.msra.mxu0 0.0
    %518 = vmatprep.subr.mxu0 0.0
    %519 = vmatpush1.msra.mxu0 0.0
    %520 = vmatprep.subr.mxu0 0.0
    %521 = vmatpush1.msra.mxu0 0.0
    %522 = vmatprep.subr.mxu0 0.0
    %523 = vmatpush1.msra.mxu0 0.0
    %524 = vmatprep.subr.mxu0 0.0
    %525 = vmatpush1.msra.mxu0 0.0
    %526 = vmatprep.mubr.f32.mxu0 0.0
    %527 = vmatmul.mubr.f32.gmra.mrb[0].mxu0 %v460
    %v528 = vpop.f32.mrb[0].mxu0
    %v529 = vadd.f32 %v432, %v528
    %v530 = vpop.f32.mrb[0].mxu0
    %v531 = vadd.f32 %v436, %v530
    %532 = vdwg.mxu0
    %533 = vmatprep.subr.mxu0 %v418
    %534 = vmatpush1.msra.mxu0 %v417
    %535 = vmatprep.subr.mxu0 %v424
    %536 = vmatpush1.msra.mxu0 %v423
    %537 = vmatprep.subr.mxu0 0.0
    %538 = vmatpush1.msra.mxu0 0.0
    %539 = vmatprep.subr.mxu0 0.0
    %540 = vmatpush1.msra.mxu0 0.0
    %541 = vmatprep.subr.mxu0 0.0
    %542 = vmatpush1.msra.mxu0 0.0
    %543 = vmatprep.subr.mxu0 0.0
    %544 = vmatpush1.msra.mxu0 0.0
    %545 = vmatprep.subr.mxu0 0.0
    %546 = vmatpush1.msra.mxu0 0.0
    %547 = vmatprep.subr.mxu0 0.0
    %548 = vmatpush1.msra.mxu0 0.0
    %549 = vmatprep.subr.mxu0 0.0
    %550 = vmatpush1.msra.mxu0 0.0
    %551 = vmatprep.subr.mxu0 0.0
    %552 = vmatpush1.msra.mxu0 0.0
    %553 = vmatprep.subr.mxu0 0.0
    %554 = vmatpush1.msra.mxu0 0.0
    %555 = vmatprep.subr.mxu0 0.0
    %556 = vmatpush1.msra.mxu0 0.0
    %557 = vmatprep.subr.mxu0 0.0
    %558 = vmatpush1.msra.mxu0 0.0
    %559 = vmatprep.subr.mxu0 0.0
    %560 = vmatpush1.msra.mxu0 0.0
    %561 = vmatprep.subr.mxu0 0.0
    %562 = vmatpush1.msra.mxu0 0.0
    %563 = vmatprep.subr.mxu0 0.0
    %564 = vmatpush1.msra.mxu0 0.0
    %565 = vmatprep.subr.mxu0 0.0
    %566 = vmatpush1.msra.mxu0 0.0
    %567 = vmatprep.subr.mxu0 0.0
    %568 = vmatpush1.msra.mxu0 0.0
    %569 = vmatprep.subr.mxu0 0.0
    %570 = vmatpush1.msra.mxu0 0.0
    %571 = vmatprep.subr.mxu0 0.0
    %572 = vmatpush1.msra.mxu0 0.0
    %573 = vmatprep.subr.mxu0 0.0
    %574 = vmatpush1.msra.mxu0 0.0
    %575 = vmatprep.subr.mxu0 0.0
    %576 = vmatpush1.msra.mxu0 0.0
    %577 = vmatprep.subr.mxu0 0.0
    %578 = vmatpush1.msra.mxu0 0.0
    %579 = vmatprep.subr.mxu0 0.0
    %580 = vmatpush1.msra.mxu0 0.0
    %581 = vmatprep.subr.mxu0 0.0
    %582 = vmatpush1.msra.mxu0 0.0
    %583 = vmatprep.subr.mxu0 0.0
    %584 = vmatpush1.msra.mxu0 0.0
    %585 = vmatprep.subr.mxu0 0.0
    %586 = vmatpush1.msra.mxu0 0.0
    %587 = vmatprep.subr.mxu0 0.0
    %588 = vmatpush1.msra.mxu0 0.0
    %589 = vmatprep.subr.mxu0 0.0
    %590 = vmatpush1.msra.mxu0 0.0
    %591 = vmatprep.subr.mxu0 0.0
    %592 = vmatpush1.msra.mxu0 0.0
    %593 = vmatprep.subr.mxu0 0.0
    %594 = vmatpush1.msra.mxu0 0.0
    %595 = vmatprep.subr.mxu0 0.0
    %596 = vmatpush1.msra.mxu0 0.0
    %597 = vmatprep.mubr.f32.mxu0 0.0
    %598 = vmatmul.mubr.f32.gmra.mrb[0].mxu0 %v460
    %v599 = vpop.f32.mrb[0].mxu0
    %v600 = vadd.f32 %v440, %v599
    %v601 = vpop.f32.mrb[0].mxu0
    %v602 = vadd.f32 %v444, %v601
    %603 = vdwg.mxu0
    %604 = vmatprep.subr.mxu0 %v420
    %605 = vmatpush1.msra.mxu0 %v419
    %606 = vmatprep.subr.mxu0 %v426
    %607 = vmatpush1.msra.mxu0 %v425
    %608 = vmatprep.subr.mxu0 0.0
    %609 = vmatpush1.msra.mxu0 0.0
    %610 = vmatprep.subr.mxu0 0.0
    %611 = vmatpush1.msra.mxu0 0.0
    %612 = vmatprep.subr.mxu0 0.0
    %613 = vmatpush1.msra.mxu0 0.0
    %614 = vmatprep.subr.mxu0 0.0
    %615 = vmatpush1.msra.mxu0 0.0
    %616 = vmatprep.subr.mxu0 0.0
    %617 = vmatpush1.msra.mxu0 0.0
    %618 = vmatprep.subr.mxu0 0.0
    %619 = vmatpush1.msra.mxu0 0.0
    %620 = vmatprep.subr.mxu0 0.0
    %621 = vmatpush1.msra.mxu0 0.0
    %622 = vmatprep.subr.mxu0 0.0
    %623 = vmatpush1.msra.mxu0 0.0
    %624 = vmatprep.subr.mxu0 0.0
    %625 = vmatpush1.msra.mxu0 0.0
    %626 = vmatprep.subr.mxu0 0.0
    %627 = vmatpush1.msra.mxu0 0.0
    %628 = vmatprep.subr.mxu0 0.0
    %629 = vmatpush1.msra.mxu0 0.0
    %630 = vmatprep.subr.mxu0 0.0
    %631 = vmatpush1.msra.mxu0 0.0
    %632 = vmatprep.subr.mxu0 0.0
    %633 = vmatpush1.msra.mxu0 0.0
    %634 = vmatprep.subr.mxu0 0.0
    %635 = vmatpush1.msra.mxu0 0.0
    %636 = vmatprep.subr.mxu0 0.0
    %637 = vmatpush1.msra.mxu0 0.0
    %638 = vmatprep.subr.mxu0 0.0
    %639 = vmatpush1.msra.mxu0 0.0
    %640 = vmatprep.subr.mxu0 0.0
    %641 = vmatpush1.msra.mxu0 0.0
    %642 = vmatprep.subr.mxu0 0.0
    %643 = vmatpush1.msra.mxu0 0.0
    %644 = vmatprep.subr.mxu0 0.0
    %645 = vmatpush1.msra.mxu0 0.0
    %646 = vmatprep.subr.mxu0 0.0
    %647 = vmatpush1.msra.mxu0 0.0
    %648 = vmatprep.subr.mxu0 0.0
    %649 = vmatpush1.msra.mxu0 0.0
    %650 = vmatprep.subr.mxu0 0.0
    %651 = vmatpush1.msra.mxu0 0.0
    %652 = vmatprep.subr.mxu0 0.0
    %653 = vmatpush1.msra.mxu0 0.0
    %654 = vmatprep.subr.mxu0 0.0
    %655 = vmatpush1.msra.mxu0 0.0
    %656 = vmatprep.subr.mxu0 0.0
    %657 = vmatpush1.msra.mxu0 0.0
    %658 = vmatprep.subr.mxu0 0.0
    %659 = vmatpush1.msra.mxu0 0.0
    %660 = vmatprep.subr.mxu0 0.0
    %661 = vmatpush1.msra.mxu0 0.0
    %662 = vmatprep.subr.mxu0 0.0
    %663 = vmatpush1.msra.mxu0 0.0
    %664 = vmatprep.subr.mxu0 0.0
    %665 = vmatpush1.msra.mxu0 0.0
    %666 = vmatprep.subr.mxu0 0.0
    %667 = vmatpush1.msra.mxu0 0.0
    %668 = vmatprep.mubr.f32.mxu0 0.0
    %669 = vmatmul.mubr.f32.gmra.mrb[0].mxu0 %v460
    %v670 = vpop.f32.mrb[0].mxu0
    %v671 = vadd.f32 %v448, %v670
    %v672 = vpop.f32.mrb[0].mxu0
    %v673 = vadd.f32 %v452, %v672
    %674 = vdwg.mxu0
    %vm675 = vcmp.ge.f32.partialorder %v529, 0.0
    %vm676 = vcmp.ge.f32.partialorder %v531, 0.0
    %vm677 = vcmp.ge.f32.partialorder %v600, 0.0
    %vm678 = vcmp.ge.f32.partialorder %v602, 0.0
    %vm679 = vcmp.ge.f32.partialorder %v671, 0.0
    %vm680 = vcmp.ge.f32.partialorder %v673, 0.0
    %v681 = vmul.f32 %v529, 0.1
    %v682 = vmul.f32 %v531, 0.1
    %v683 = vmul.f32 %v600, 0.1
    %v684 = vmul.f32 %v602, 0.1
    %v685 = vmul.f32 %v671, 0.1
    %v686 = vmul.f32 %v673, 0.1
    %v687 = vsel %vm675, %v529, %v681
    %v688 = vsel %vm676, %v531, %v682
    %v689 = vsel %vm677, %v600, %v683
    %v690 = vsel %vm678, %v602, %v684
    %v691 = vsel %vm679, %v671, %v685
    %v692 = vsel %vm680, %v673, %v686
    %693 = vst [vmem:[#allocation12] sm:$0xff] %v687
    %694 = vst [vmem:[#allocation12 + $0x8] sm:$0xff] %v688
    %695 = vst [vmem:[#allocation12 + $0x10] sm:$0xff] %v689
    %696 = vst [vmem:[#allocation12 + $0x18] sm:$0xff] %v690
    %697 = vst [vmem:[#allocation12 + $0x20] sm:$0xff] %v691
    %698 = vst [vmem:[#allocation12 + $0x28] sm:$0xff] %v692
    // Predicated region
    $region54: #{tpu_custom_call.1} parent=1 // pred_check
      _
    $region55: #{tpu_custom_call.1} parent=1 // pred_check_branch
      %700 = sbr.rel (0) target = $region57
    $region56: #{tpu_custom_call.1} parent=1 // pred_region
      %s702 = ssub.s32 128, 128
      %703 = vsyncadd [#allocation4], %s702
      %s705 = sshll.u32 [#allocation11], 4
      %s706 = int_to_ptr.vmem [resolvable:$true] %s705
      %708 = dma.vmem_to_hbm [thread:$0]  %s706, 128, %s8, [#allocation4]
    $region57: #{tpu_custom_call.1} parent=1 // pred_fallthru
      _
    // Predicated region
    $region58: #{tpu_custom_call.1} parent=1 // pred_check
      _
    $region59: #{tpu_custom_call.1} parent=1 // pred_check_branch
      %710 = sbr.rel (0) target = $region61
    $region60: #{tpu_custom_call.1} parent=1 // pred_region
      %s712 = ssub.s32 768, 768
      %713 = vsyncadd [#allocation13], %s712
      %s715 = sshll.u32 [#allocation12], 4
      %s716 = int_to_ptr.vmem [resolvable:$true] %s715
      %718 = dma.vmem_to_hbm [thread:$0]  %s716, 768, %s9, [#allocation13]
    $region61: #{tpu_custom_call.1} parent=1 // pred_fallthru
      _
    // Predicated region
    $region62: #{tpu_custom_call.1} parent=1 // pred_check
      _
    $region63: #{tpu_custom_call.1} parent=1 // pred_check_branch
      %720 = sbr.rel (0) target = $region65
    $region64: #{tpu_custom_call.1} parent=1 // pred_region
      %721 = dma.done [#allocation4], 128
    $region65: #{tpu_custom_call.1} parent=1 // pred_fallthru
      _
    // Predicated region
    $region66: #{tpu_custom_call.1} parent=1 // pred_check
      _
    $region67: #{tpu_custom_call.1} parent=1 // pred_check_branch
      %723 = sbr.rel (0) target = $region69
    $region68: #{tpu_custom_call.1} parent=1 // pred_region
      %724 = dma.done [#allocation13], 768
    $region69: #{tpu_custom_call.1} parent=1 // pred_fallthru
      _
    %725 = vsyncpa [#allocation3], 1
    %726 = vsyncpa [#allocation6], 1
    %727 = vsyncpa [#allocation9], 1
    %728 = vsyncpa [#allocation4], 1
    %729 = vsyncpa [#allocation13], 1

</llo_original>
